<compile_context>
chip_gen: v6e
topology: v6e:2x2x1
jax: 0.10.0
libtpu: 0.0.40
codegen_flags: <defaults>
</compile_context>

<pallas_src>
import math

import jax
import jax.numpy as jnp
from jax.experimental import pallas as pl
from jax.experimental.pallas import tpu as pltpu

_LANE = 128
_EPS = 1e-5
_INV_SQRT2 = 1.0 / math.sqrt(2.0)


def _round_up(n, m):
    return ((n + m - 1) // m) * m


def _bn_gelu(h, gb):
    """Training-mode BatchNorm (batch stats, biased var) + exact erf GELU, all f32."""
    mean = jnp.mean(h, axis=0, keepdims=True)
    var = jnp.mean(jnp.square(h - mean), axis=0, keepdims=True)
    gamma = gb[0:1, :]
    beta = gb[1:2, :]
    scale = gamma * jax.lax.rsqrt(var + _EPS)      # rsqrt -> EUP slot
    shift = beta - mean * scale
    hn = h * scale + shift                         # single FMA sweep over (B, tDm)
    # Exact (erf-based) GELU, matching nn.GELU() default.
    return 0.5 * hn * (1.0 + jax.lax.erf(hn * _INV_SQRT2))


def classifier_kernel_single(x_ref, w1_ref, gb_ref, w2_ref, b2_ref, o_ref):
    """Fast path: whole problem in one block. No scratch, no init/finalize."""
    h = jnp.dot(x_ref[...], w1_ref[...], preferred_element_type=jnp.float32)
    g = _bn_gelu(h, gb_ref[...].astype(jnp.float32))
    out = jnp.dot(g.astype(w2_ref.dtype), w2_ref[...],
                  preferred_element_type=jnp.float32)
    o_ref[...] = (out + b2_ref[...].astype(jnp.float32)).astype(o_ref.dtype)


def classifier_kernel_tiled(x_ref, w1_ref, gb_ref, w2_ref, b2_ref, o_ref, acc_ref):
    """General path: grid = (Dout tiles [parallel], Dm tiles [arbitrary, reduction last]).

    Note: GEMM1 + BN + GELU depend only on the Dm tile, so they are recomputed per
    Dout tile; Dout tiling is only engaged for very large Dout (tile_dn default keeps
    it a single tile otherwise)."""
    k = pl.program_id(1)

    @pl.when(k == 0)
    def _():
        # Fold the second-Linear bias into the accumulator init (saves one VPU pass).
        acc_ref[...] = jnp.broadcast_to(
            b2_ref[...].astype(jnp.float32), acc_ref.shape)

    h = jnp.dot(x_ref[...], w1_ref[...], preferred_element_type=jnp.float32)
    g = _bn_gelu(h, gb_ref[...].astype(jnp.float32))
    acc_ref[...] += jnp.dot(g.astype(w2_ref.dtype), w2_ref[...],
                            preferred_element_type=jnp.float32)

    @pl.when(k == pl.num_programs(1) - 1)
    def _():
        o_ref[...] = acc_ref[...].astype(o_ref.dtype)


def make_classifier(w1, gamma, beta, w2, b2, *, tile_dm=512, tile_dn=2048,
                    mxu_dtype=None, vmem_limit_bytes=64 * 1024 * 1024):
    """Pad/pack parameters ONCE and return a jitted forward(x) closure.

    w1: (Din, Dm); gamma/beta: (Dm,); w2: (Dm, Dout); b2: (Dout,).
    tile_dm: hidden-dim (reduction) tile.  tile_dn: output-dim (parallel) tile.
    mxu_dtype: optionally cast x/w1/w2 to e.g. jnp.bfloat16 for the MXU (BN/GELU stay f32).
    """
    Din, Dm = w1.shape
    Dout = w2.shape[1]

    # Tile sizes (lane-aligned); dims rounded up to their tile -> no divisibility assert.
    tDm = min(_round_up(tile_dm, _LANE), _round_up(Dm, _LANE))
    tDn = min(_round_up(tile_dn, _LANE), _round_up(Dout, _LANE))
    Din_p = _round_up(Din, _LANE)
    Dm_p = _round_up(Dm, tDm)
    Dout_p = _round_up(Dout, tDn)

    w_dtype = mxu_dtype if mxu_dtype is not None else w1.dtype

    # One-time, lane-dense, mathematically-neutral parameter padding (hoisted out of
    # the per-call path).  gamma pad = 0 so padded hidden features normalize to exactly
    # zero regardless of the (also zero) w2 pad rows.
    w1_p = jnp.pad(w1, ((0, Din_p - Din), (0, Dm_p - Dm))).astype(w_dtype)
    gb = jnp.concatenate(
        [jnp.pad(gamma.reshape(1, Dm), ((0, 0), (0, Dm_p - Dm))),
         jnp.pad(beta.reshape(1, Dm), ((0, 0), (0, Dm_p - Dm)))],
        axis=0)                                               # (2, Dm_p) param slab
    w2_p = jnp.pad(w2, ((0, Dm_p - Dm), (0, Dout_p - Dout))).astype(w_dtype)
    b2_p = jnp.pad(b2.reshape(1, Dout), ((0, 0), (0, Dout_p - Dout)))

    grid_n = Dout_p // tDn
    grid_k = Dm_p // tDm

    def forward(x):
        B, Din_in = x.shape
        assert Din_in == Din, "input feature dim mismatch"
        out_dtype = x.dtype

        x_p = x
        if Din_p != Din:
            x_p = jnp.pad(x_p, ((0, 0), (0, Din_p - Din)))
        if mxu_dtype is not None:
            x_p = x_p.astype(mxu_dtype)

        if grid_n == 1 and grid_k == 1:
            # Single-block fast path: whole-array refs in VMEM, no grid, no scratch.
            out_p = pl.pallas_call(
                classifier_kernel_single,
                out_shape=jax.ShapeDtypeStruct((B, Dout_p), out_dtype),
                compiler_params=pltpu.CompilerParams(
                    vmem_limit_bytes=vmem_limit_bytes),
            )(x_p, w1_p, gb, w2_p, b2_p)
        else:
            out_p = pl.pallas_call(
                classifier_kernel_tiled,
                out_shape=jax.ShapeDtypeStruct((B, Dout_p), out_dtype),
                grid_spec=pltpu.PrefetchScalarGridSpec(
                    num_scalar_prefetch=0,
                    grid=(grid_n, grid_k),
                    in_specs=[
                        pl.BlockSpec((B, Din_p), lambda n, k: (0, 0)),     # x (batch resident)
                        pl.BlockSpec((Din_p, tDm), lambda n, k: (0, k)),   # w1 Dm tile
                        pl.BlockSpec((2, tDm), lambda n, k: (0, k)),       # [gamma; beta] tile
                        pl.BlockSpec((tDm, tDn), lambda n, k: (k, n)),     # w2 tile
                        pl.BlockSpec((1, tDn), lambda n, k: (0, n)),       # b2 tile
                    ],
                    out_specs=pl.BlockSpec((B, tDn), lambda n, k: (0, n)),
                    scratch_shapes=[pltpu.VMEM((B, tDn), jnp.float32)],
                ),
                compiler_params=pltpu.CompilerParams(
                    # Dout axis independent (megacore-shardable on v7x); Dm axis is the
                    # reduction for the second GEMM (accumulator resident), kept last.
                    dimension_semantics=("parallel", "arbitrary"),
                    vmem_limit_bytes=vmem_limit_bytes),
            )(x_p, w1_p, gb, w2_p, b2_p)

        return out_p[:, :Dout] if Dout_p != Dout else out_p

    return jax.jit(forward)


def _reference(x, w1, gamma, beta, w2, b2):
    h = x @ w1
    mean = h.mean(axis=0, keepdims=True)
    var = ((h - mean) ** 2).mean(axis=0, keepdims=True)
    hn = (h - mean) / jnp.sqrt(var + _EPS) * gamma[None, :] + beta[None, :]
    g = 0.5 * hn * (1.0 + jax.lax.erf(hn / math.sqrt(2.0)))
    return g @ w2 + b2[None, :]


if __name__ == "__main__":
    # ---- Test 1: module's native config (fast single-block path) ----
    # Classifier(inplanes=32, ouplanes=16, hidreduce=1) -> midplanes=32, dropout=0.0
    batch, inplanes, ouplanes, hidreduce = 8, 32, 16, 1
    midplanes = inplanes // hidreduce

    key = jax.random.PRNGKey(0)
    kx, kw1, kw2, kb2, kx2, kw12, kw22, kb22 = jax.random.split(key, 8)

    x = jax.random.normal(kx, (batch, inplanes), dtype=jnp.float32)
    bound1 = 1.0 / math.sqrt(inplanes)
    w1 = jax.random.uniform(kw1, (inplanes, midplanes), jnp.float32, -bound1, bound1)
    gamma = jnp.ones((midplanes,), jnp.float32)    # BatchNorm weight init
    beta = jnp.zeros((midplanes,), jnp.float32)    # BatchNorm bias init
    bound2 = 1.0 / math.sqrt(midplanes)
    w2 = jax.random.uniform(kw2, (midplanes, ouplanes), jnp.float32, -bound2, bound2)
    b2 = jax.random.uniform(kb2, (ouplanes,), jnp.float32, -bound2, bound2)

    classifier = make_classifier(w1, gamma, beta, w2, b2)
    out = classifier(x)
    jax.block_until_ready(out)

    ref = _reference(x, w1, gamma, beta, w2, b2)
    assert out.shape == ref.shape, "shape mismatch vs reference (fast path)"
    assert jnp.allclose(out, ref, atol=1e-4, rtol=1e-4), "mismatch vs reference (fast path)"

    # ---- Test 2: force the tiled (parallel Dout x reduction Dm) path ----
    B2, Din2, Dm2, Dout2 = 8, 64, 384, 256
    x2 = jax.random.normal(kx2, (B2, Din2), dtype=jnp.float32)
    w1b = jax.random.uniform(kw12, (Din2, Dm2), jnp.float32, -0.1, 0.1)
    gamma2 = jnp.ones((Dm2,), jnp.float32)
    beta2 = jnp.zeros((Dm2,), jnp.float32)
    w2b = jax.random.uniform(kw22, (Dm2, Dout2), jnp.float32, -0.05, 0.05)
    b2b = jax.random.uniform(kb22, (Dout2,), jnp.float32, -0.05, 0.05)

    classifier2 = make_classifier(w1b, gamma2, beta2, w2b, b2b,
                                  tile_dm=128, tile_dn=128)   # grid = (2, 3)
    out2 = classifier2(x2)
    jax.block_until_ready(out2)

    ref2 = _reference(x2, w1b, gamma2, beta2, w2b, b2b)
    assert out2.shape == ref2.shape, "shape mismatch vs reference (tiled path)"
    assert jnp.allclose(out2, ref2, atol=1e-4, rtol=1e-4), "mismatch vs reference (tiled path)"

    print("KERNEL_OK")
</pallas_src>

<mosaic_0001>
module attributes {stable_mosaic.version = 11 : i64} {
  func.func @classifier_kernel_single(%arg0: memref<8x128xf32, #tpu.memory_space<vmem>>, %arg1: memref<128x128xf32, #tpu.memory_space<vmem>>, %arg2: memref<2x128xf32, #tpu.memory_space<vmem>>, %arg3: memref<128x128xf32, #tpu.memory_space<vmem>>, %arg4: memref<1x128xf32, #tpu.memory_space<vmem>>, %arg5: memref<8x128xf32, #tpu.memory_space<vmem>>) attributes {dimension_semantics = [], scalar_prefetch = 0 : i64, scratch_operands = 0 : i64, tpu.core_type = #tpu.core_type<tc>} {
    %c0 = arith.constant 0 : index
    %c0_0 = arith.constant 0 : index
    %0 = vector.load %arg0[%c0, %c0_0] : memref<8x128xf32, #tpu.memory_space<vmem>>, vector<8x128xf32>
    %c0_1 = arith.constant 0 : index
    %c0_2 = arith.constant 0 : index
    %1 = vector.load %arg1[%c0_1, %c0_2] : memref<128x128xf32, #tpu.memory_space<vmem>>, vector<128x128xf32>
    %cst = arith.constant dense<0.000000e+00> : vector<8x128xf32>
    %2 = tpu.matmul %0, %1, %cst {dimension_numbers = #tpu.dot_dimension_numbers<[1], [0], [0], [1], [0, 0, 1, 1], [], []>} : vector<8x128xf32>, vector<128x128xf32>, vector<8x128xf32> -> vector<8x128xf32>
    %c0_3 = arith.constant 0 : index
    %c0_4 = arith.constant 0 : index
    %3 = vector.load %arg2[%c0_3, %c0_4] : memref<2x128xf32, #tpu.memory_space<vmem>>, vector<2x128xf32>
    %cst_5 = arith.constant dense<0.000000e+00> : vector<128xf32>
    %4 = vector.multi_reduction <add>, %2, %cst_5 [0] : vector<8x128xf32> to vector<128xf32>
    %5 = vector.shape_cast %4 : vector<128xf32> to vector<1x128xf32>
    %cst_6 = arith.constant 8.000000e+00 : f32
    %6 = vector.broadcast %cst_6 : f32 to vector<1x128xf32>
    %7 = arith.divf %5, %6 : vector<1x128xf32>
    %8 = vector.broadcast %7 : vector<1x128xf32> to vector<8x128xf32>
    %9 = arith.subf %2, %8 : vector<8x128xf32>
    %10 = arith.mulf %9, %9 : vector<8x128xf32>
    %cst_7 = arith.constant dense<0.000000e+00> : vector<128xf32>
    %11 = vector.multi_reduction <add>, %10, %cst_7 [0] : vector<8x128xf32> to vector<128xf32>
    %12 = vector.shape_cast %11 : vector<128xf32> to vector<1x128xf32>
    %cst_8 = arith.constant 8.000000e+00 : f32
    %13 = vector.broadcast %cst_8 : f32 to vector<1x128xf32>
    %14 = arith.divf %12, %13 : vector<1x128xf32>
    %15 = vector.extract_strided_slice %3 {offsets = [0, 0], sizes = [1, 128], strides = [1, 1]} : vector<2x128xf32> to vector<1x128xf32>
    %16 = vector.extract_strided_slice %3 {offsets = [1, 0], sizes = [1, 128], strides = [1, 1]} : vector<2x128xf32> to vector<1x128xf32>
    %cst_9 = arith.constant 9.99999974E-6 : f32
    %17 = vector.broadcast %cst_9 : f32 to vector<1x128xf32>
    %18 = arith.addf %14, %17 : vector<1x128xf32>
    %19 = math.rsqrt %18 : vector<1x128xf32>
    %20 = arith.mulf %15, %19 : vector<1x128xf32>
    %21 = arith.mulf %7, %20 : vector<1x128xf32>
    %22 = arith.subf %16, %21 : vector<1x128xf32>
    %23 = vector.broadcast %20 : vector<1x128xf32> to vector<8x128xf32>
    %24 = arith.mulf %2, %23 : vector<8x128xf32>
    %25 = vector.broadcast %22 : vector<1x128xf32> to vector<8x128xf32>
    %26 = arith.addf %24, %25 : vector<8x128xf32>
    %cst_10 = arith.constant 5.000000e-01 : f32
    %27 = vector.broadcast %cst_10 : f32 to vector<8x128xf32>
    %28 = arith.mulf %27, %26 : vector<8x128xf32>
    %cst_11 = arith.constant 0.707106769 : f32
    %29 = vector.broadcast %cst_11 : f32 to vector<8x128xf32>
    %30 = arith.mulf %26, %29 : vector<8x128xf32>
    %31 = math.erf %30 : vector<8x128xf32>
    %cst_12 = arith.constant 1.000000e+00 : f32
    %32 = vector.broadcast %cst_12 : f32 to vector<8x128xf32>
    %33 = arith.addf %32, %31 : vector<8x128xf32>
    %34 = arith.mulf %28, %33 : vector<8x128xf32>
    %c0_13 = arith.constant 0 : index
    %c0_14 = arith.constant 0 : index
    %35 = vector.load %arg3[%c0_13, %c0_14] : memref<128x128xf32, #tpu.memory_space<vmem>>, vector<128x128xf32>
    %cst_15 = arith.constant dense<0.000000e+00> : vector<8x128xf32>
    %36 = tpu.matmul %34, %35, %cst_15 {dimension_numbers = #tpu.dot_dimension_numbers<[1], [0], [0], [1], [0, 0, 1, 1], [], []>} : vector<8x128xf32>, vector<128x128xf32>, vector<8x128xf32> -> vector<8x128xf32>
    %c0_16 = arith.constant 0 : index
    %c0_17 = arith.constant 0 : index
    %37 = vector.load %arg4[%c0_16, %c0_17] : memref<1x128xf32, #tpu.memory_space<vmem>>, vector<1x128xf32>
    %38 = vector.broadcast %37 : vector<1x128xf32> to vector<8x128xf32>
    %39 = arith.addf %36, %38 : vector<8x128xf32>
    %c0_18 = arith.constant 0 : index
    %c0_19 = arith.constant 0 : index
    %40 = vector.load %arg5[%c0_18, %c0_19] : memref<8x128xf32, #tpu.memory_space<vmem>>, vector<8x128xf32>
    tpu.vector_store %arg5[%c0_18, %c0_19], %39 {strides = array<i32>} : memref<8x128xf32, #tpu.memory_space<vmem>>, vector<8x128xf32>,
    return
  }
}

</mosaic_0001>

<llo_original>
// kernel: forward.1
$region0: #{forward.1}
  #allocation0 [shape = 'u32[]', space=smem, size = 0x4, offset = 0x4, fixed_abs, tag = 'smem constant byte address 0x4 - core index']
  #allocation1 [shape = 'u32[144,128]{1,0:T(1,128)}', space=vmem, size = 0x12000, scoped, tag = 'internal scratch']
  %s0 = inlined_call_operand.vmem [shape: f32[8,128], index: 0, kind: input, shape index: {}]
  %s1 = inlined_call_operand.hbm [shape: f32[128,128], index: 1, kind: input, shape index: {}]
  %s2 = inlined_call_operand.vmem [shape: f32[2,128], index: 2, kind: input, shape index: {}]
  %s3 = inlined_call_operand.hbm [shape: f32[128,128], index: 3, kind: input, shape index: {}]
  %s4 = inlined_call_operand.vmem [shape: f32[1,128], index: 4, kind: input, shape index: {}]
  %s5 = inlined_call_operand.hbm [shape: f32[8,128], index: 5, kind: output, shape index: {}]
  %s6 = sld [smem:[#allocation0]]
  $region38: #{forward.1} parent=0
    _
  %s8 = ssub.s32 1, %s6
  %s9 = scalar_select 0, %s8, %s6
  $region1: #{forward.1} parent=0
    #allocation2 [shape = 'u8[65536]{0}', space=vmem, size = 0x10000, scoped, tag = 'input window, operand 1, single buffered']
    #allocation3 [shape = 's32[1]{0}', space=sflag, size = 0x4, scoped, tag = 'scoped memory for forward.1']
    #allocation4 [shape = 's32[1]{0}', space=sflag, size = 0x4, scoped, tag = 'scoped memory for forward.1']
    #allocation5 [shape = 'u8[65536]{0}', space=vmem, size = 0x10000, scoped, tag = 'input window, operand 3, single buffered']
    #allocation6 [shape = 's32[1]{0}', space=sflag, size = 0x4, scoped, tag = 'scoped memory for forward.1']
    #allocation7 [shape = 'u8[4096]{0}', space=vmem, size = 0x1000, scoped, tag = 'output window, operand 0, single buffered']
    %10 = vsyncpa [#allocation3], 0
    %11 = vsyncpa [#allocation6], 0
    %12 = vsyncpa [#allocation4], 0
    // Predicated region
    $region2: #{forward.1} parent=1 // pred_check
      _
    $region3: #{forward.1} parent=1 // pred_check_branch
      %14 = sbr.rel (0) target = $region5
    $region4: #{forward.1} parent=1 // pred_region
      _
    $region5: #{forward.1} parent=1 // pred_fallthru
      _
    // Predicated region
    $region6: #{forward.1} parent=1 // pred_check
      _
    $region7: #{forward.1} parent=1 // pred_check_branch
      %16 = sbr.rel (0) target = $region9
    $region8: #{forward.1} parent=1 // pred_region
      %s18 = ssub.s32 2048, 2048
      %19 = vsyncadd [#allocation3], %s18
      %s20 = sshll.u32 [#allocation2], 4
      %s21 = int_to_ptr.vmem [resolvable:$true] %s20
      %26 = dma.hbm_to_vmem [thread:$0]  %s1, 2048, %s21, [#allocation3], 128, 128, 8
    $region9: #{forward.1} parent=1 // pred_fallthru
      _
    // Predicated region
    $region10: #{forward.1} parent=1 // pred_check
      _
    $region11: #{forward.1} parent=1 // pred_check_branch
      %28 = sbr.rel (0) target = $region13
    $region12: #{forward.1} parent=1 // pred_region
      _
    $region13: #{forward.1} parent=1 // pred_fallthru
      _
    // Predicated region
    $region14: #{forward.1} parent=1 // pred_check
      _
    $region15: #{forward.1} parent=1 // pred_check_branch
      %30 = sbr.rel (0) target = $region17
    $region16: #{forward.1} parent=1 // pred_region
      %s32 = ssub.s32 2048, 2048
      %33 = vsyncadd [#allocation6], %s32
      %s34 = sshll.u32 [#allocation5], 4
      %s35 = int_to_ptr.vmem [resolvable:$true] %s34
      %40 = dma.hbm_to_vmem [thread:$0]  %s3, 2048, %s35, [#allocation6], 128, 128, 8
    $region17: #{forward.1} parent=1 // pred_fallthru
      _
    // Predicated region
    $region18: #{forward.1} parent=1 // pred_check
      _
    $region19: #{forward.1} parent=1 // pred_check_branch
      %42 = sbr.rel (0) target = $region21
    $region20: #{forward.1} parent=1 // pred_region
      _
    $region21: #{forward.1} parent=1 // pred_fallthru
      _
    // Predicated region
    $region22: #{forward.1} parent=1 // pred_check
      _
    $region23: #{forward.1} parent=1 // pred_check_branch
      %44 = sbr.rel (0) target = $region25
    $region24: #{forward.1} parent=1 // pred_region
      %45 = dma.done [#allocation3], 2048
    $region25: #{forward.1} parent=1 // pred_fallthru
      _
    // Predicated region
    $region26: #{forward.1} parent=1 // pred_check
      _
    $region27: #{forward.1} parent=1 // pred_check_branch
      %47 = sbr.rel (0) target = $region29
    $region28: #{forward.1} parent=1 // pred_region
      %48 = dma.done [#allocation6], 2048
    $region29: #{forward.1} parent=1 // pred_fallthru
      _
    %v49 = vld [vmem:[%s0] sm:$0xff]
    %v50 = vld [vmem:[#allocation2] sm:$0xff]
    %v51 = vld [vmem:[#allocation2 + $0x8] sm:$0xff]
    %v52 = vld [vmem:[#allocation2 + $0x10] sm:$0xff]
    %v53 = vld [vmem:[#allocation2 + $0x18] sm:$0xff]
    %v54 = vld [vmem:[#allocation2 + $0x20] sm:$0xff]
    %v55 = vld [vmem:[#allocation2 + $0x28] sm:$0xff]
    %v56 = vld [vmem:[#allocation2 + $0x30] sm:$0xff]
    %v57 = vld [vmem:[#allocation2 + $0x38] sm:$0xff]
    %v58 = vld [vmem:[#allocation2 + $0x40] sm:$0xff]
    %v59 = vld [vmem:[#allocation2 + $0x48] sm:$0xff]
    %v60 = vld [vmem:[#allocation2 + $0x50] sm:$0xff]
    %v61 = vld [vmem:[#allocation2 + $0x58] sm:$0xff]
    %v62 = vld [vmem:[#allocation2 + $0x60] sm:$0xff]
    %v63 = vld [vmem:[#allocation2 + $0x68] sm:$0xff]
    %v64 = vld [vmem:[#allocation2 + $0x70] sm:$0xff]
    %v65 = vld [vmem:[#allocation2 + $0x78] sm:$0xff]
    %66 = vmatprep.subr.mxu0 0.0
    %67 = vmatpush1.msra.mxu0 %v65
    %68 = vmatprep.subr.mxu0 0.0
    %69 = vmatpush1.msra.mxu0 %v64
    %70 = vmatprep.subr.mxu0 0.0
    %71 = vmatpush1.msra.mxu0 %v63
    %72 = vmatprep.subr.mxu0 0.0
    %73 = vmatpush1.msra.mxu0 %v62
    %74 = vmatprep.subr.mxu0 0.0
    %75 = vmatpush1.msra.mxu0 %v61
    %76 = vmatprep.subr.mxu0 0.0
    %77 = vmatpush1.msra.mxu0 %v60
    %78 = vmatprep.subr.mxu0 0.0
    %79 = vmatpush1.msra.mxu0 %v59
    %80 = vmatprep.subr.mxu0 0.0
    %81 = vmatpush1.msra.mxu0 %v58
    %82 = vmatprep.subr.mxu0 0.0
    %83 = vmatpush1.msra.mxu0 %v57
    %84 = vmatprep.subr.mxu0 0.0
    %85 = vmatpush1.msra.mxu0 %v56
    %86 = vmatprep.subr.mxu0 0.0
    %87 = vmatpush1.msra.mxu0 %v55
    %88 = vmatprep.subr.mxu0 0.0
    %89 = vmatpush1.msra.mxu0 %v54
    %90 = vmatprep.subr.mxu0 0.0
    %91 = vmatpush1.msra.mxu0 %v53
    %92 = vmatprep.subr.mxu0 0.0
    %93 = vmatpush1.msra.mxu0 %v52
    %94 = vmatprep.subr.mxu0 0.0
    %95 = vmatpush1.msra.mxu0 %v51
    %96 = vmatprep.subr.mxu0 0.0
    %97 = vmatpush1.msra.mxu0 %v50
    %98 = vmatprep.subr.mxu0 0.0
    %99 = vmatpush2.msra.mxu0 0.0
    %100 = vmatprep.subr.mxu0 0.0
    %101 = vmatpush2.msra.mxu0 0.0
    %102 = vmatprep.subr.mxu0 0.0
    %103 = vmatpush2.msra.mxu0 0.0
    %104 = vmatprep.subr.mxu0 0.0
    %105 = vmatpush2.msra.mxu0 0.0
    %106 = vmatprep.subr.mxu0 0.0
    %107 = vmatpush2.msra.mxu0 0.0
    %108 = vmatprep.subr.mxu0 0.0
    %109 = vmatpush2.msra.mxu0 0.0
    %110 = vmatprep.subr.mxu0 0.0
    %111 = vmatpush2.msra.mxu0 0.0
    %112 = vmatprep.subr.mxu0 0.0
    %113 = vmatpush2.msra.mxu0 0.0
    %114 = vmatprep.subr.mxu0 0.0
    %115 = vmatpush2.msra.mxu0 0.0
    %116 = vmatprep.subr.mxu0 0.0
    %117 = vmatpush2.msra.mxu0 0.0
    %118 = vmatprep.subr.mxu0 0.0
    %119 = vmatpush2.msra.mxu0 0.0
    %120 = vmatprep.subr.mxu0 0.0
    %121 = vmatpush2.msra.mxu0 0.0
    %122 = vmatprep.subr.mxu0 0.0
    %123 = vmatpush2.msra.mxu0 0.0
    %124 = vmatprep.subr.mxu0 0.0
    %125 = vmatpush2.msra.mxu0 0.0
    %126 = vmatprep.subr.mxu0 0.0
    %127 = vmatpush2.msra.mxu0 0.0
    %128 = vmatprep.subr.mxu0 0.0
    %129 = vmatpush2.msra.mxu0 0.0
    %130 = vmatprep.mubr.f32.mxu0 0.0
    %131 = vmatmul.mubr.f32.gmra.mxu0 %v49
    %v132 = vpop.f32.mrf.mxu0
    %v133 = vadd.f32 0.0, %v132
    %v134 = vpop.f32.mrf.mxu0
    %135 = vdwg.mxu0
    %v136 = vld [vmem:[%s2] sm:$0x3]
    %v137 = vrot.slane %v133, 4
    %v138 = vadd.f32 %v133, %v137
    %v139 = vrot.slane %v138, 2
    %v140 = vadd.f32 %v138, %v139
    %v141 = vrot.slane %v140, 1
    %v142 = vadd.f32 %v140, %v141
    %v143 = vrcp.pop 8.0
    %v144 = vmul.f32 %v142, %v143
    %v145 = vsub.f32 %v133, %v144
    %v146 = vmul.f32 %v145, %v145
    %v147 = vrot.slane %v146, 4
    %v148 = vadd.f32 %v146, %v147
    %v149 = vrot.slane %v148, 2
    %v150 = vadd.f32 %v148, %v149
    %v151 = vrot.slane %v150, 1
    %v152 = vadd.f32 %v150, %v151
    %v153 = vmul.f32 %v152, %v143
    %v154 = vadd.f32 %v153, 1e-05
    %v155 = vrsqrt.pop %v154
    %v156 = vmul.f32 %v136, %v155
    %v157 = vmul.f32 %v144, %v156
    %v159 = vrot.slane %v157, 7
    %v161 = vsub.f32 %v136, %v159
    %v162 = vlaneseq
    %v163 = vshrl.u32 %v162, 7
    %v164 = vsub.s32 0, %v163
    %v165 = vrot.slane %v156, %v164
    %v166 = vmul.f32 %v133, %v165
    %v167 = vlaneseq
    %v168 = vshrl.u32 %v167, 7
    %v169 = vsub.s32 1, %v168
    %v170 = vrot.slane %v161, %v169
    %v171 = vadd.f32 %v166, %v170
    %v172 = vmul.f32 %v171, 0.5
    %v173 = vmul.f32 %v171, 0.70710677
    %v174 = verf.f32.pop %v173
    %v175 = vadd.f32 %v174, 1.0
    %v176 = vmul.f32 %v172, %v175
    %v177 = vld [vmem:[#allocation5] sm:$0xff]
    %v178 = vld [vmem:[#allocation5 + $0x8] sm:$0xff]
    %v179 = vld [vmem:[#allocation5 + $0x10] sm:$0xff]
    %v180 = vld [vmem:[#allocation5 + $0x18] sm:$0xff]
    %v181 = vld [vmem:[#allocation5 + $0x20] sm:$0xff]
    %v182 = vld [vmem:[#allocation5 + $0x28] sm:$0xff]
    %v183 = vld [vmem:[#allocation5 + $0x30] sm:$0xff]
    %v184 = vld [vmem:[#allocation5 + $0x38] sm:$0xff]
    %v185 = vld [vmem:[#allocation5 + $0x40] sm:$0xff]
    %v186 = vld [vmem:[#allocation5 + $0x48] sm:$0xff]
    %v187 = vld [vmem:[#allocation5 + $0x50] sm:$0xff]
    %v188 = vld [vmem:[#allocation5 + $0x58] sm:$0xff]
    %v189 = vld [vmem:[#allocation5 + $0x60] sm:$0xff]
    %v190 = vld [vmem:[#allocation5 + $0x68] sm:$0xff]
    %v191 = vld [vmem:[#allocation5 + $0x70] sm:$0xff]
    %v192 = vld [vmem:[#allocation5 + $0x78] sm:$0xff]
    %v193 = vld [vmem:[%s4] sm:$0x1]
    %v195 = vlaneseq
    %v196 = vshrl.u32 %v195, 7
    %v197 = vsub.s32 0, %v196
    %v198 = vrot.slane %v193, %v197
    %200 = vmatprep.subr.mxu0 0.0
    %201 = vmatpush1.msra.mxu0 %v192
    %202 = vmatprep.subr.mxu0 0.0
    %203 = vmatpush1.msra.mxu0 %v191
    %204 = vmatprep.subr.mxu0 0.0
    %205 = vmatpush1.msra.mxu0 %v190
    %206 = vmatprep.subr.mxu0 0.0
    %207 = vmatpush1.msra.mxu0 %v189
    %208 = vmatprep.subr.mxu0 0.0
    %209 = vmatpush1.msra.mxu0 %v188
    %210 = vmatprep.subr.mxu0 0.0
    %211 = vmatpush1.msra.mxu0 %v187
    %212 = vmatprep.subr.mxu0 0.0
    %213 = vmatpush1.msra.mxu0 %v186
    %214 = vmatprep.subr.mxu0 0.0
    %215 = vmatpush1.msra.mxu0 %v185
    %216 = vmatprep.subr.mxu0 0.0
    %217 = vmatpush1.msra.mxu0 %v184
    %218 = vmatprep.subr.mxu0 0.0
    %219 = vmatpush1.msra.mxu0 %v183
    %220 = vmatprep.subr.mxu0 0.0
    %221 = vmatpush1.msra.mxu0 %v182
    %222 = vmatprep.subr.mxu0 0.0
    %223 = vmatpush1.msra.mxu0 %v181
    %224 = vmatprep.subr.mxu0 0.0
    %225 = vmatpush1.msra.mxu0 %v180
    %226 = vmatprep.subr.mxu0 0.0
    %227 = vmatpush1.msra.mxu0 %v179
    %228 = vmatprep.subr.mxu0 0.0
    %229 = vmatpush1.msra.mxu0 %v178
    %230 = vmatprep.subr.mxu0 0.0
    %231 = vmatpush1.msra.mxu0 %v177
    %232 = vmatprep.subr.mxu0 0.0
    %233 = vmatpush2.msra.mxu0 0.0
    %234 = vmatprep.subr.mxu0 0.0
    %235 = vmatpush2.msra.mxu0 0.0
    %236 = vmatprep.subr.mxu0 0.0
    %237 = vmatpush2.msra.mxu0 0.0
    %238 = vmatprep.subr.mxu0 0.0
    %239 = vmatpush2.msra.mxu0 0.0
    %240 = vmatprep.subr.mxu0 0.0
    %241 = vmatpush2.msra.mxu0 0.0
    %242 = vmatprep.subr.mxu0 0.0
    %243 = vmatpush2.msra.mxu0 0.0
    %244 = vmatprep.subr.mxu0 0.0
    %245 = vmatpush2.msra.mxu0 0.0
    %246 = vmatprep.subr.mxu0 0.0
    %247 = vmatpush2.msra.mxu0 0.0
    %248 = vmatprep.subr.mxu0 0.0
    %249 = vmatpush2.msra.mxu0 0.0
    %250 = vmatprep.subr.mxu0 0.0
    %251 = vmatpush2.msra.mxu0 0.0
    %252 = vmatprep.subr.mxu0 0.0
    %253 = vmatpush2.msra.mxu0 0.0
    %254 = vmatprep.subr.mxu0 0.0
    %255 = vmatpush2.msra.mxu0 0.0
    %256 = vmatprep.subr.mxu0 0.0
    %257 = vmatpush2.msra.mxu0 0.0
    %258 = vmatprep.subr.mxu0 0.0
    %259 = vmatpush2.msra.mxu0 0.0
    %260 = vmatprep.subr.mxu0 0.0
    %261 = vmatpush2.msra.mxu0 0.0
    %262 = vmatprep.subr.mxu0 0.0
    %263 = vmatpush2.msra.mxu0 0.0
    %264 = vmatprep.mubr.f32.mxu0 0.0
    %265 = vmatmul.mubr.f32.gmra.mxu0 %v176
    %v266 = vpop.f32.mrf.mxu0
    %v267 = vadd.f32 %v198, %v266
    %v268 = vpop.f32.mrf.mxu0
    %269 = vdwg.mxu0
    %270 = vst [vmem:[#allocation7] sm:$0xff] %v267
    // Predicated region
    $region30: #{forward.1} parent=1 // pred_check
      _
    $region31: #{forward.1} parent=1 // pred_check_branch
      %272 = sbr.rel (0) target = $region33
    $region32: #{forward.1} parent=1 // pred_region
      %s274 = ssub.s32 128, 128
      %275 = vsyncadd [#allocation4], %s274
      %s277 = sshll.u32 [#allocation7], 4
      %s278 = int_to_ptr.vmem [resolvable:$true] %s277
      %280 = dma.vmem_to_hbm [thread:$0]  %s278, 128, %s5, [#allocation4]
    $region33: #{forward.1} parent=1 // pred_fallthru
      _
    // Predicated region
    $region34: #{forward.1} parent=1 // pred_check
      _
    $region35: #{forward.1} parent=1 // pred_check_branch
      %282 = sbr.rel (0) target = $region37
    $region36: #{forward.1} parent=1 // pred_region
      %283 = dma.done [#allocation4], 128
    $region37: #{forward.1} parent=1 // pred_fallthru
      _
    %284 = vsyncpa [#allocation3], 1
    %285 = vsyncpa [#allocation6], 1
    %286 = vsyncpa [#allocation4], 1

</llo_original>
